<compile_context>
chip_gen: v6e
topology: v6e:2x2x1
jax: 0.10.0
libtpu: 0.0.40
codegen_flags: <defaults>
</compile_context>

<pallas_src>
from functools import partial

import jax
import jax.numpy as jnp
import numpy as np
from jax import lax
from jax.experimental import pallas as pl
from jax.experimental.pallas import tpu as pltpu


def _round_up(x, m):
    return ((x + m - 1) // m) * m


def rnn_recurrence_kernel(tok_ref, wih_ref, bsum_ref, whh_ref, wfc_ref, bfc_ref,
                          out_ref, xt_scratch):
    # tok_ref    : (B, T)    int32, SMEM  token ids
    # wih_ref    : (I, H)    f32,   VMEM  W_ih^T  (one-hot matmul == row gather)
    # bsum_ref   : (1, H)    f32,   VMEM  b_ih + b_hh
    # whh_ref    : (H, H)    bf16,  VMEM  W_hh^T
    # wfc_ref    : (H, Opad) bf16,  VMEM  W_fc^T zero-padded to a lane-dense width
    # bfc_ref    : (1, Opad) f32,   VMEM  b_fc zero-padded
    # out_ref    : (B, Opad) f32,   VMEM  padded logits (sliced to O in the wrapper)
    # xt_scratch : (B, H)    f32,   VMEM  per-step gathered input projection
    B, T = tok_ref.shape
    H = whh_ref.shape[0]

    whh = whh_ref[...]      # bf16, loaded once, reused every timestep
    bsum = bsum_ref[...]    # f32

    def step(t, h):
        # One-hot @ W_ih^T == gather of W_ih^T rows for this step's tokens.
        # B is a tiny static constant, so unroll the gather over batch; these loads do
        # not depend on h and can hide under the recurrent matmul.
        for b in range(B):
            tok = tok_ref[b, t]                                   # SMEM scalar read
            xt_scratch[pl.ds(b, 1), :] = wih_ref[pl.ds(tok, 1), :]
        x_t = xt_scratch[...] + bsum
        # Loop-carried critical path: (B,H)x(H,H) bf16 MXU matmul -> f32 add -> tanh.
        hh = jnp.dot(h.astype(jnp.bfloat16), whh, preferred_element_type=jnp.float32)
        return jnp.tanh(x_t + hh)

    h0 = jnp.zeros((B, H), jnp.float32)
    # T is small and static -> full unroll for LLO scheduler visibility (the recurrence
    # itself stays serial on the loop-carried dependence).
    h = lax.fori_loop(0, T, step, h0, unroll=True)

    out_ref[...] = (
        jnp.dot(h.astype(jnp.bfloat16), wfc_ref[...], preferred_element_type=jnp.float32)
        + bfc_ref[...]
    ).astype(out_ref.dtype)


def prepare_params(params, lane=128):
    """One-time parameter prep: transposes, bias folding, lane-dense FC padding, bf16 casts."""
    hidden_size = params["w_ih"].shape[0]
    output_size = params["w_fc"].shape[0]
    o_pad = _round_up(output_size, lane)
    wfc_pad = (jnp.zeros((hidden_size, o_pad), jnp.float32)
               .at[:, :output_size].set(params["w_fc"].T))
    bfc_pad = (jnp.zeros((1, o_pad), jnp.float32)
               .at[:, :output_size].set(params["b_fc"]))
    return {
        "wih_t": params["w_ih"].T.astype(jnp.float32),               # (I, H)
        "b_sum": (params["b_ih"] + params["b_hh"]).reshape(1, -1),   # (1, H)
        "whh_t": params["w_hh"].T.astype(jnp.bfloat16),              # (H, H)
        "wfc_pad": wfc_pad.astype(jnp.bfloat16),                     # (H, Opad)
        "bfc_pad": bfc_pad,                                          # (1, Opad)
    }


@partial(jax.jit, static_argnames=("output_size",))
def rnn_net_pallas(x_tokens, prepped, output_size):
    """x_tokens: (B, T) integer token indices in [0, input_size)."""
    B, T = x_tokens.shape
    H = prepped["whh_t"].shape[0]
    o_pad = prepped["bfc_pad"].shape[1]

    smem = pl.BlockSpec(memory_space=pltpu.MemorySpace.SMEM)
    vmem = pl.BlockSpec(memory_space=pltpu.MemorySpace.VMEM)

    out_pad = pl.pallas_call(
        rnn_recurrence_kernel,
        out_shape=jax.ShapeDtypeStruct((B, o_pad), jnp.float32),
        in_specs=[smem, vmem, vmem, vmem, vmem, vmem],
        out_specs=vmem,
        scratch_shapes=[pltpu.VMEM((B, H), jnp.float32)],
    )(x_tokens.astype(jnp.int32), prepped["wih_t"], prepped["b_sum"],
      prepped["whh_t"], prepped["wfc_pad"], prepped["bfc_pad"])

    return out_pad[:, :output_size]


def rnn_net_reference(x_tokens, params):
    """Pure-JAX f32 reference mirroring the PyTorch forward."""
    w_ih, w_hh, b_ih, b_hh, w_fc, b_fc = (
        params["w_ih"], params["w_hh"], params["b_ih"],
        params["b_hh"], params["w_fc"], params["b_fc"])
    input_size = w_ih.shape[1]
    B, T = x_tokens.shape
    x_onehot = jax.nn.one_hot(x_tokens, input_size, dtype=jnp.float32)  # (B, T, I)
    h = jnp.zeros((B, w_ih.shape[0]), jnp.float32)
    for t in range(T):
        h = jnp.tanh(x_onehot[:, t, :] @ w_ih.T + b_ih + h @ w_hh.T + b_hh)
    return h @ w_fc.T + b_fc


def init_params(key, input_size, hidden_size, output_size):
    k = 1.0 / np.sqrt(hidden_size)
    keys = jax.random.split(key, 6)
    return {
        "w_ih": jax.random.uniform(keys[0], (hidden_size, input_size), jnp.float32, -k, k),
        "w_hh": jax.random.uniform(keys[1], (hidden_size, hidden_size), jnp.float32, -k, k),
        "b_ih": jax.random.uniform(keys[2], (hidden_size,), jnp.float32, -k, k),
        "b_hh": jax.random.uniform(keys[3], (hidden_size,), jnp.float32, -k, k),
        "w_fc": jax.random.uniform(keys[4], (output_size, hidden_size), jnp.float32, -k, k),
        "b_fc": jax.random.uniform(keys[5], (output_size,), jnp.float32, -k, k),
    }


if __name__ == "__main__":
    INPUT_SIZE = 16   # vocab / one-hot width
    HIDDEN_SIZE = 32
    OUTPUT_SIZE = 8
    BATCH = 2
    SEQ = 8

    key = jax.random.PRNGKey(0)
    k_params, k_x = jax.random.split(key)
    params = init_params(k_params, INPUT_SIZE, HIDDEN_SIZE, OUTPUT_SIZE)
    x_tokens = jax.random.randint(k_x, (BATCH, SEQ), 0, INPUT_SIZE, dtype=jnp.int32)

    prepped = prepare_params(params)
    out = rnn_net_pallas(x_tokens, prepped, OUTPUT_SIZE)
    out = jax.block_until_ready(out)

    ref = rnn_net_reference(x_tokens, params)
    # Tolerance loosened vs. the pure-f32 version: the recurrent/FC matmuls feed the MXU
    # bf16 operands (f32 accumulation), per the performance review.
    np.testing.assert_allclose(np.asarray(out), np.asarray(ref), rtol=2e-2, atol=2e-2)

    print("KERNEL_OK")
</pallas_src>

<mosaic_0001>
module attributes {stable_mosaic.version = 11 : i64} {
  func.func @rnn_recurrence_kernel(%arg0: memref<2x8xi32, #tpu.memory_space<smem>>, %arg1: memref<16x32xf32, #tpu.memory_space<vmem>>, %arg2: memref<1x32xf32, #tpu.memory_space<vmem>>, %arg3: memref<32x32xbf16, #tpu.memory_space<vmem>>, %arg4: memref<32x128xbf16, #tpu.memory_space<vmem>>, %arg5: memref<1x128xf32, #tpu.memory_space<vmem>>, %arg6: memref<2x128xf32, #tpu.memory_space<vmem>>, %arg7: memref<2x32xf32, #tpu.memory_space<vmem>>) attributes {dimension_semantics = [], scalar_prefetch = 0 : i64, scratch_operands = 1 : i64, tpu.core_type = #tpu.core_type<tc>} {
    %c0 = arith.constant 0 : index
    %c0_0 = arith.constant 0 : index
    %0 = vector.load %arg3[%c0, %c0_0] : memref<32x32xbf16, #tpu.memory_space<vmem>>, vector<32x32xbf16>
    %c0_1 = arith.constant 0 : index
    %c0_2 = arith.constant 0 : index
    %1 = vector.load %arg2[%c0_1, %c0_2] : memref<1x32xf32, #tpu.memory_space<vmem>>, vector<1x32xf32>
    %cst = arith.constant 0.000000e+00 : f32
    %2 = vector.broadcast %cst : f32 to vector<2x32xf32>
    %c0_i32 = arith.constant 0 : i32
    %c0_3 = arith.constant 0 : index
    %3 = arith.index_cast %c0_i32 : i32 to index
    %4 = memref.load %arg0[%c0_3, %3] : memref<2x8xi32, #tpu.memory_space<smem>>
    %5 = arith.index_cast %4 : i32 to index
    %c0_4 = arith.constant 0 : index
    %6 = vector.load %arg1[%5, %c0_4] : memref<16x32xf32, #tpu.memory_space<vmem>>, vector<1x32xf32>
    %c0_5 = arith.constant 0 : index
    %c0_6 = arith.constant 0 : index
    %7 = vector.load %arg7[%c0_5, %c0_6] : memref<2x32xf32, #tpu.memory_space<vmem>>, vector<1x32xf32>
    tpu.vector_store %arg7[%c0_5, %c0_6], %6 {strides = array<i32>} : memref<2x32xf32, #tpu.memory_space<vmem>>, vector<1x32xf32>,
    %c1 = arith.constant 1 : index
    %8 = arith.index_cast %c0_i32 : i32 to index
    %9 = memref.load %arg0[%c1, %8] : memref<2x8xi32, #tpu.memory_space<smem>>
    %10 = arith.index_cast %9 : i32 to index
    %c0_7 = arith.constant 0 : index
    %11 = vector.load %arg1[%10, %c0_7] : memref<16x32xf32, #tpu.memory_space<vmem>>, vector<1x32xf32>
    %c1_8 = arith.constant 1 : index
    %c0_9 = arith.constant 0 : index
    %12 = vector.load %arg7[%c1_8, %c0_9] : memref<2x32xf32, #tpu.memory_space<vmem>>, vector<1x32xf32>
    tpu.vector_store %arg7[%c1_8, %c0_9], %11 {strides = array<i32>} : memref<2x32xf32, #tpu.memory_space<vmem>>, vector<1x32xf32>,
    %c0_10 = arith.constant 0 : index
    %c0_11 = arith.constant 0 : index
    %13 = vector.load %arg7[%c0_10, %c0_11] : memref<2x32xf32, #tpu.memory_space<vmem>>, vector<2x32xf32>
    %14 = vector.broadcast %1 : vector<1x32xf32> to vector<2x32xf32>
    %15 = arith.addf %13, %14 : vector<2x32xf32>
    %16 = arith.truncf %2 : vector<2x32xf32> to vector<2x32xbf16>
    %cst_12 = arith.constant dense<0.000000e+00> : vector<2x32xf32>
    %17 = tpu.matmul %16, %0, %cst_12 {dimension_numbers = #tpu.dot_dimension_numbers<[1], [0], [0], [1], [0, 0, 1, 1], [], []>} : vector<2x32xbf16>, vector<32x32xbf16>, vector<2x32xf32> -> vector<2x32xf32>
    %18 = arith.addf %15, %17 : vector<2x32xf32>
    %19 = math.tanh %18 : vector<2x32xf32>
    %c1_i32 = arith.constant 1 : i32
    %c0_13 = arith.constant 0 : index
    %20 = arith.index_cast %c1_i32 : i32 to index
    %21 = memref.load %arg0[%c0_13, %20] : memref<2x8xi32, #tpu.memory_space<smem>>
    %22 = arith.index_cast %21 : i32 to index
    %c0_14 = arith.constant 0 : index
    %23 = vector.load %arg1[%22, %c0_14] : memref<16x32xf32, #tpu.memory_space<vmem>>, vector<1x32xf32>
    %c0_15 = arith.constant 0 : index
    %c0_16 = arith.constant 0 : index
    %24 = vector.load %arg7[%c0_15, %c0_16] : memref<2x32xf32, #tpu.memory_space<vmem>>, vector<1x32xf32>
    tpu.vector_store %arg7[%c0_15, %c0_16], %23 {strides = array<i32>} : memref<2x32xf32, #tpu.memory_space<vmem>>, vector<1x32xf32>,
    %c1_17 = arith.constant 1 : index
    %25 = arith.index_cast %c1_i32 : i32 to index
    %26 = memref.load %arg0[%c1_17, %25] : memref<2x8xi32, #tpu.memory_space<smem>>
    %27 = arith.index_cast %26 : i32 to index
    %c0_18 = arith.constant 0 : index
    %28 = vector.load %arg1[%27, %c0_18] : memref<16x32xf32, #tpu.memory_space<vmem>>, vector<1x32xf32>
    %c1_19 = arith.constant 1 : index
    %c0_20 = arith.constant 0 : index
    %29 = vector.load %arg7[%c1_19, %c0_20] : memref<2x32xf32, #tpu.memory_space<vmem>>, vector<1x32xf32>
    tpu.vector_store %arg7[%c1_19, %c0_20], %28 {strides = array<i32>} : memref<2x32xf32, #tpu.memory_space<vmem>>, vector<1x32xf32>,
    %c0_21 = arith.constant 0 : index
    %c0_22 = arith.constant 0 : index
    %30 = vector.load %arg7[%c0_21, %c0_22] : memref<2x32xf32, #tpu.memory_space<vmem>>, vector<2x32xf32>
    %31 = vector.broadcast %1 : vector<1x32xf32> to vector<2x32xf32>
    %32 = arith.addf %30, %31 : vector<2x32xf32>
    %33 = arith.truncf %19 : vector<2x32xf32> to vector<2x32xbf16>
    %cst_23 = arith.constant dense<0.000000e+00> : vector<2x32xf32>
    %34 = tpu.matmul %33, %0, %cst_23 {dimension_numbers = #tpu.dot_dimension_numbers<[1], [0], [0], [1], [0, 0, 1, 1], [], []>} : vector<2x32xbf16>, vector<32x32xbf16>, vector<2x32xf32> -> vector<2x32xf32>
    %35 = arith.addf %32, %34 : vector<2x32xf32>
    %36 = math.tanh %35 : vector<2x32xf32>
    %c2_i32 = arith.constant 2 : i32
    %c0_24 = arith.constant 0 : index
    %37 = arith.index_cast %c2_i32 : i32 to index
    %38 = memref.load %arg0[%c0_24, %37] : memref<2x8xi32, #tpu.memory_space<smem>>
    %39 = arith.index_cast %38 : i32 to index
    %c0_25 = arith.constant 0 : index
    %40 = vector.load %arg1[%39, %c0_25] : memref<16x32xf32, #tpu.memory_space<vmem>>, vector<1x32xf32>
    %c0_26 = arith.constant 0 : index
    %c0_27 = arith.constant 0 : index
    %41 = vector.load %arg7[%c0_26, %c0_27] : memref<2x32xf32, #tpu.memory_space<vmem>>, vector<1x32xf32>
    tpu.vector_store %arg7[%c0_26, %c0_27], %40 {strides = array<i32>} : memref<2x32xf32, #tpu.memory_space<vmem>>, vector<1x32xf32>,
    %c1_28 = arith.constant 1 : index
    %42 = arith.index_cast %c2_i32 : i32 to index
    %43 = memref.load %arg0[%c1_28, %42] : memref<2x8xi32, #tpu.memory_space<smem>>
    %44 = arith.index_cast %43 : i32 to index
    %c0_29 = arith.constant 0 : index
    %45 = vector.load %arg1[%44, %c0_29] : memref<16x32xf32, #tpu.memory_space<vmem>>, vector<1x32xf32>
    %c1_30 = arith.constant 1 : index
    %c0_31 = arith.constant 0 : index
    %46 = vector.load %arg7[%c1_30, %c0_31] : memref<2x32xf32, #tpu.memory_space<vmem>>, vector<1x32xf32>
    tpu.vector_store %arg7[%c1_30, %c0_31], %45 {strides = array<i32>} : memref<2x32xf32, #tpu.memory_space<vmem>>, vector<1x32xf32>,
    %c0_32 = arith.constant 0 : index
    %c0_33 = arith.constant 0 : index
    %47 = vector.load %arg7[%c0_32, %c0_33] : memref<2x32xf32, #tpu.memory_space<vmem>>, vector<2x32xf32>
    %48 = vector.broadcast %1 : vector<1x32xf32> to vector<2x32xf32>
    %49 = arith.addf %47, %48 : vector<2x32xf32>
    %50 = arith.truncf %36 : vector<2x32xf32> to vector<2x32xbf16>
    %cst_34 = arith.constant dense<0.000000e+00> : vector<2x32xf32>
    %51 = tpu.matmul %50, %0, %cst_34 {dimension_numbers = #tpu.dot_dimension_numbers<[1], [0], [0], [1], [0, 0, 1, 1], [], []>} : vector<2x32xbf16>, vector<32x32xbf16>, vector<2x32xf32> -> vector<2x32xf32>
    %52 = arith.addf %49, %51 : vector<2x32xf32>
    %53 = math.tanh %52 : vector<2x32xf32>
    %c3_i32 = arith.constant 3 : i32
    %c0_35 = arith.constant 0 : index
    %54 = arith.index_cast %c3_i32 : i32 to index
    %55 = memref.load %arg0[%c0_35, %54] : memref<2x8xi32, #tpu.memory_space<smem>>
    %56 = arith.index_cast %55 : i32 to index
    %c0_36 = arith.constant 0 : index
    %57 = vector.load %arg1[%56, %c0_36] : memref<16x32xf32, #tpu.memory_space<vmem>>, vector<1x32xf32>
    %c0_37 = arith.constant 0 : index
    %c0_38 = arith.constant 0 : index
    %58 = vector.load %arg7[%c0_37, %c0_38] : memref<2x32xf32, #tpu.memory_space<vmem>>, vector<1x32xf32>
    tpu.vector_store %arg7[%c0_37, %c0_38], %57 {strides = array<i32>} : memref<2x32xf32, #tpu.memory_space<vmem>>, vector<1x32xf32>,
    %c1_39 = arith.constant 1 : index
    %59 = arith.index_cast %c3_i32 : i32 to index
    %60 = memref.load %arg0[%c1_39, %59] : memref<2x8xi32, #tpu.memory_space<smem>>
    %61 = arith.index_cast %60 : i32 to index
    %c0_40 = arith.constant 0 : index
    %62 = vector.load %arg1[%61, %c0_40] : memref<16x32xf32, #tpu.memory_space<vmem>>, vector<1x32xf32>
    %c1_41 = arith.constant 1 : index
    %c0_42 = arith.constant 0 : index
    %63 = vector.load %arg7[%c1_41, %c0_42] : memref<2x32xf32, #tpu.memory_space<vmem>>, vector<1x32xf32>
    tpu.vector_store %arg7[%c1_41, %c0_42], %62 {strides = array<i32>} : memref<2x32xf32, #tpu.memory_space<vmem>>, vector<1x32xf32>,
    %c0_43 = arith.constant 0 : index
    %c0_44 = arith.constant 0 : index
    %64 = vector.load %arg7[%c0_43, %c0_44] : memref<2x32xf32, #tpu.memory_space<vmem>>, vector<2x32xf32>
    %65 = vector.broadcast %1 : vector<1x32xf32> to vector<2x32xf32>
    %66 = arith.addf %64, %65 : vector<2x32xf32>
    %67 = arith.truncf %53 : vector<2x32xf32> to vector<2x32xbf16>
    %cst_45 = arith.constant dense<0.000000e+00> : vector<2x32xf32>
    %68 = tpu.matmul %67, %0, %cst_45 {dimension_numbers = #tpu.dot_dimension_numbers<[1], [0], [0], [1], [0, 0, 1, 1], [], []>} : vector<2x32xbf16>, vector<32x32xbf16>, vector<2x32xf32> -> vector<2x32xf32>
    %69 = arith.addf %66, %68 : vector<2x32xf32>
    %70 = math.tanh %69 : vector<2x32xf32>
    %c4_i32 = arith.constant 4 : i32
    %c0_46 = arith.constant 0 : index
    %71 = arith.index_cast %c4_i32 : i32 to index
    %72 = memref.load %arg0[%c0_46, %71] : memref<2x8xi32, #tpu.memory_space<smem>>
    %73 = arith.index_cast %72 : i32 to index
    %c0_47 = arith.constant 0 : index
    %74 = vector.load %arg1[%73, %c0_47] : memref<16x32xf32, #tpu.memory_space<vmem>>, vector<1x32xf32>
    %c0_48 = arith.constant 0 : index
    %c0_49 = arith.constant 0 : index
    %75 = vector.load %arg7[%c0_48, %c0_49] : memref<2x32xf32, #tpu.memory_space<vmem>>, vector<1x32xf32>
    tpu.vector_store %arg7[%c0_48, %c0_49], %74 {strides = array<i32>} : memref<2x32xf32, #tpu.memory_space<vmem>>, vector<1x32xf32>,
    %c1_50 = arith.constant 1 : index
    %76 = arith.index_cast %c4_i32 : i32 to index
    %77 = memref.load %arg0[%c1_50, %76] : memref<2x8xi32, #tpu.memory_space<smem>>
    %78 = arith.index_cast %77 : i32 to index
    %c0_51 = arith.constant 0 : index
    %79 = vector.load %arg1[%78, %c0_51] : memref<16x32xf32, #tpu.memory_space<vmem>>, vector<1x32xf32>
    %c1_52 = arith.constant 1 : index
    %c0_53 = arith.constant 0 : index
    %80 = vector.load %arg7[%c1_52, %c0_53] : memref<2x32xf32, #tpu.memory_space<vmem>>, vector<1x32xf32>
    tpu.vector_store %arg7[%c1_52, %c0_53], %79 {strides = array<i32>} : memref<2x32xf32, #tpu.memory_space<vmem>>, vector<1x32xf32>,
    %c0_54 = arith.constant 0 : index
    %c0_55 = arith.constant 0 : index
    %81 = vector.load %arg7[%c0_54, %c0_55] : memref<2x32xf32, #tpu.memory_space<vmem>>, vector<2x32xf32>
    %82 = vector.broadcast %1 : vector<1x32xf32> to vector<2x32xf32>
    %83 = arith.addf %81, %82 : vector<2x32xf32>
    %84 = arith.truncf %70 : vector<2x32xf32> to vector<2x32xbf16>
    %cst_56 = arith.constant dense<0.000000e+00> : vector<2x32xf32>
    %85 = tpu.matmul %84, %0, %cst_56 {dimension_numbers = #tpu.dot_dimension_numbers<[1], [0], [0], [1], [0, 0, 1, 1], [], []>} : vector<2x32xbf16>, vector<32x32xbf16>, vector<2x32xf32> -> vector<2x32xf32>
    %86 = arith.addf %83, %85 : vector<2x32xf32>
    %87 = math.tanh %86 : vector<2x32xf32>
    %c5_i32 = arith.constant 5 : i32
    %c0_57 = arith.constant 0 : index
    %88 = arith.index_cast %c5_i32 : i32 to index
    %89 = memref.load %arg0[%c0_57, %88] : memref<2x8xi32, #tpu.memory_space<smem>>
    %90 = arith.index_cast %89 : i32 to index
    %c0_58 = arith.constant 0 : index
    %91 = vector.load %arg1[%90, %c0_58] : memref<16x32xf32, #tpu.memory_space<vmem>>, vector<1x32xf32>
    %c0_59 = arith.constant 0 : index
    %c0_60 = arith.constant 0 : index
    %92 = vector.load %arg7[%c0_59, %c0_60] : memref<2x32xf32, #tpu.memory_space<vmem>>, vector<1x32xf32>
    tpu.vector_store %arg7[%c0_59, %c0_60], %91 {strides = array<i32>} : memref<2x32xf32, #tpu.memory_space<vmem>>, vector<1x32xf32>,
    %c1_61 = arith.constant 1 : index
    %93 = arith.index_cast %c5_i32 : i32 to index
    %94 = memref.load %arg0[%c1_61, %93] : memref<2x8xi32, #tpu.memory_space<smem>>
    %95 = arith.index_cast %94 : i32 to index
    %c0_62 = arith.constant 0 : index
    %96 = vector.load %arg1[%95, %c0_62] : memref<16x32xf32, #tpu.memory_space<vmem>>, vector<1x32xf32>
    %c1_63 = arith.constant 1 : index
    %c0_64 = arith.constant 0 : index
    %97 = vector.load %arg7[%c1_63, %c0_64] : memref<2x32xf32, #tpu.memory_space<vmem>>, vector<1x32xf32>
    tpu.vector_store %arg7[%c1_63, %c0_64], %96 {strides = array<i32>} : memref<2x32xf32, #tpu.memory_space<vmem>>, vector<1x32xf32>,
    %c0_65 = arith.constant 0 : index
    %c0_66 = arith.constant 0 : index
    %98 = vector.load %arg7[%c0_65, %c0_66] : memref<2x32xf32, #tpu.memory_space<vmem>>, vector<2x32xf32>
    %99 = vector.broadcast %1 : vector<1x32xf32> to vector<2x32xf32>
    %100 = arith.addf %98, %99 : vector<2x32xf32>
    %101 = arith.truncf %87 : vector<2x32xf32> to vector<2x32xbf16>
    %cst_67 = arith.constant dense<0.000000e+00> : vector<2x32xf32>
    %102 = tpu.matmul %101, %0, %cst_67 {dimension_numbers = #tpu.dot_dimension_numbers<[1], [0], [0], [1], [0, 0, 1, 1], [], []>} : vector<2x32xbf16>, vector<32x32xbf16>, vector<2x32xf32> -> vector<2x32xf32>
    %103 = arith.addf %100, %102 : vector<2x32xf32>
    %104 = math.tanh %103 : vector<2x32xf32>
    %c6_i32 = arith.constant 6 : i32
    %c0_68 = arith.constant 0 : index
    %105 = arith.index_cast %c6_i32 : i32 to index
    %106 = memref.load %arg0[%c0_68, %105] : memref<2x8xi32, #tpu.memory_space<smem>>
    %107 = arith.index_cast %106 : i32 to index
    %c0_69 = arith.constant 0 : index
    %108 = vector.load %arg1[%107, %c0_69] : memref<16x32xf32, #tpu.memory_space<vmem>>, vector<1x32xf32>
    %c0_70 = arith.constant 0 : index
    %c0_71 = arith.constant 0 : index
    %109 = vector.load %arg7[%c0_70, %c0_71] : memref<2x32xf32, #tpu.memory_space<vmem>>, vector<1x32xf32>
    tpu.vector_store %arg7[%c0_70, %c0_71], %108 {strides = array<i32>} : memref<2x32xf32, #tpu.memory_space<vmem>>, vector<1x32xf32>,
    %c1_72 = arith.constant 1 : index
    %110 = arith.index_cast %c6_i32 : i32 to index
    %111 = memref.load %arg0[%c1_72, %110] : memref<2x8xi32, #tpu.memory_space<smem>>
    %112 = arith.index_cast %111 : i32 to index
    %c0_73 = arith.constant 0 : index
    %113 = vector.load %arg1[%112, %c0_73] : memref<16x32xf32, #tpu.memory_space<vmem>>, vector<1x32xf32>
    %c1_74 = arith.constant 1 : index
    %c0_75 = arith.constant 0 : index
    %114 = vector.load %arg7[%c1_74, %c0_75] : memref<2x32xf32, #tpu.memory_space<vmem>>, vector<1x32xf32>
    tpu.vector_store %arg7[%c1_74, %c0_75], %113 {strides = array<i32>} : memref<2x32xf32, #tpu.memory_space<vmem>>, vector<1x32xf32>,
    %c0_76 = arith.constant 0 : index
    %c0_77 = arith.constant 0 : index
    %115 = vector.load %arg7[%c0_76, %c0_77] : memref<2x32xf32, #tpu.memory_space<vmem>>, vector<2x32xf32>
    %116 = vector.broadcast %1 : vector<1x32xf32> to vector<2x32xf32>
    %117 = arith.addf %115, %116 : vector<2x32xf32>
    %118 = arith.truncf %104 : vector<2x32xf32> to vector<2x32xbf16>
    %cst_78 = arith.constant dense<0.000000e+00> : vector<2x32xf32>
    %119 = tpu.matmul %118, %0, %cst_78 {dimension_numbers = #tpu.dot_dimension_numbers<[1], [0], [0], [1], [0, 0, 1, 1], [], []>} : vector<2x32xbf16>, vector<32x32xbf16>, vector<2x32xf32> -> vector<2x32xf32>
    %120 = arith.addf %117, %119 : vector<2x32xf32>
    %121 = math.tanh %120 : vector<2x32xf32>
    %c7_i32 = arith.constant 7 : i32
    %c0_79 = arith.constant 0 : index
    %122 = arith.index_cast %c7_i32 : i32 to index
    %123 = memref.load %arg0[%c0_79, %122] : memref<2x8xi32, #tpu.memory_space<smem>>
    %124 = arith.index_cast %123 : i32 to index
    %c0_80 = arith.constant 0 : index
    %125 = vector.load %arg1[%124, %c0_80] : memref<16x32xf32, #tpu.memory_space<vmem>>, vector<1x32xf32>
    %c0_81 = arith.constant 0 : index
    %c0_82 = arith.constant 0 : index
    %126 = vector.load %arg7[%c0_81, %c0_82] : memref<2x32xf32, #tpu.memory_space<vmem>>, vector<1x32xf32>
    tpu.vector_store %arg7[%c0_81, %c0_82], %125 {strides = array<i32>} : memref<2x32xf32, #tpu.memory_space<vmem>>, vector<1x32xf32>,
    %c1_83 = arith.constant 1 : index
    %127 = arith.index_cast %c7_i32 : i32 to index
    %128 = memref.load %arg0[%c1_83, %127] : memref<2x8xi32, #tpu.memory_space<smem>>
    %129 = arith.index_cast %128 : i32 to index
    %c0_84 = arith.constant 0 : index
    %130 = vector.load %arg1[%129, %c0_84] : memref<16x32xf32, #tpu.memory_space<vmem>>, vector<1x32xf32>
    %c1_85 = arith.constant 1 : index
    %c0_86 = arith.constant 0 : index
    %131 = vector.load %arg7[%c1_85, %c0_86] : memref<2x32xf32, #tpu.memory_space<vmem>>, vector<1x32xf32>
    tpu.vector_store %arg7[%c1_85, %c0_86], %130 {strides = array<i32>} : memref<2x32xf32, #tpu.memory_space<vmem>>, vector<1x32xf32>,
    %c0_87 = arith.constant 0 : index
    %c0_88 = arith.constant 0 : index
    %132 = vector.load %arg7[%c0_87, %c0_88] : memref<2x32xf32, #tpu.memory_space<vmem>>, vector<2x32xf32>
    %133 = vector.broadcast %1 : vector<1x32xf32> to vector<2x32xf32>
    %134 = arith.addf %132, %133 : vector<2x32xf32>
    %135 = arith.truncf %121 : vector<2x32xf32> to vector<2x32xbf16>
    %cst_89 = arith.constant dense<0.000000e+00> : vector<2x32xf32>
    %136 = tpu.matmul %135, %0, %cst_89 {dimension_numbers = #tpu.dot_dimension_numbers<[1], [0], [0], [1], [0, 0, 1, 1], [], []>} : vector<2x32xbf16>, vector<32x32xbf16>, vector<2x32xf32> -> vector<2x32xf32>
    %137 = arith.addf %134, %136 : vector<2x32xf32>
    %138 = math.tanh %137 : vector<2x32xf32>
    %c8_i32 = arith.constant 8 : i32
    %139 = arith.truncf %138 : vector<2x32xf32> to vector<2x32xbf16>
    %c0_90 = arith.constant 0 : index
    %c0_91 = arith.constant 0 : index
    %140 = vector.load %arg4[%c0_90, %c0_91] : memref<32x128xbf16, #tpu.memory_space<vmem>>, vector<32x128xbf16>
    %cst_92 = arith.constant dense<0.000000e+00> : vector<2x128xf32>
    %141 = tpu.matmul %139, %140, %cst_92 {dimension_numbers = #tpu.dot_dimension_numbers<[1], [0], [0], [1], [0, 0, 1, 1], [], []>} : vector<2x32xbf16>, vector<32x128xbf16>, vector<2x128xf32> -> vector<2x128xf32>
    %c0_93 = arith.constant 0 : index
    %c0_94 = arith.constant 0 : index
    %142 = vector.load %arg5[%c0_93, %c0_94] : memref<1x128xf32, #tpu.memory_space<vmem>>, vector<1x128xf32>
    %143 = vector.broadcast %142 : vector<1x128xf32> to vector<2x128xf32>
    %144 = arith.addf %141, %143 : vector<2x128xf32>
    %c0_95 = arith.constant 0 : index
    %c0_96 = arith.constant 0 : index
    %145 = vector.load %arg6[%c0_95, %c0_96] : memref<2x128xf32, #tpu.memory_space<vmem>>, vector<2x128xf32>
    tpu.vector_store %arg6[%c0_95, %c0_96], %144 {strides = array<i32>} : memref<2x128xf32, #tpu.memory_space<vmem>>, vector<2x128xf32>,
    return
  }
}

</mosaic_0001>

<llo_original>
// kernel: rnn_net_pallas.1
$region0: #{rnn_net_pallas.1}
  #allocation0 [shape = 'u32[]', space=smem, size = 0x4, offset = 0x4, fixed_abs, tag = 'smem constant byte address 0x4 - core index']
  #allocation1 [shape = 'u32[144,128]{1,0:T(1,128)}', space=vmem, size = 0x12000, scoped, tag = 'internal scratch']
  #allocation2 [shape = 'f32[2,32]{1,0:T(2,128)}', space=vmem, size = 0x400, scoped, tag = 'scratch operand']
  %s0 = inlined_call_operand.hbm [shape: s32[2,8], index: 0, kind: input, shape index: {}]
  %s1 = inlined_call_operand.hbm [shape: f32[16,32], index: 1, kind: input, shape index: {}]
  %s2 = inlined_call_operand.vmem [shape: f32[1,32], index: 2, kind: input, shape index: {}]
  %s3 = inlined_call_operand.hbm [shape: bf16[32,32], index: 3, kind: input, shape index: {}]
  %s4 = inlined_call_operand.hbm [shape: bf16[32,128], index: 4, kind: input, shape index: {}]
  %s5 = inlined_call_operand.vmem [shape: f32[1,128], index: 5, kind: input, shape index: {}]
  %s6 = inlined_call_operand.hbm [shape: f32[2,128], index: 6, kind: output, shape index: {}]
  %s7 = sld [smem:[#allocation0]]
  $region50: #{rnn_net_pallas.1} parent=0
    _
  %s9 = ssub.s32 1, %s7
  %s10 = scalar_select 0, %s9, %s7
  $region1: #{rnn_net_pallas.1} parent=0
    #allocation3 [shape = 'u8[1024]{0}', space=smem, size = 0x400, scoped, tag = 'input window, operand 0, single buffered']
    #allocation4 [shape = 's32[1]{0}', space=sflag, size = 0x4, scoped, tag = 'scoped memory for rnn_net_pallas.1']
    #allocation5 [shape = 's32[1]{0}', space=sflag, size = 0x4, scoped, tag = 'scoped memory for rnn_net_pallas.1']
    #allocation6 [shape = 's32[1]{0}', space=sflag, size = 0x4, scoped, tag = 'scoped memory for rnn_net_pallas.1']
    #allocation7 [shape = 'u8[8192]{0}', space=vmem, size = 0x2000, scoped, tag = 'input window, operand 1, single buffered']
    #allocation8 [shape = 'u8[8192]{0}', space=vmem, size = 0x2000, scoped, tag = 'input window, operand 3, single buffered']
    #allocation9 [shape = 's32[1]{0}', space=sflag, size = 0x4, scoped, tag = 'scoped memory for rnn_net_pallas.1']
    #allocation10 [shape = 'u8[8192]{0}', space=vmem, size = 0x2000, scoped, tag = 'input window, operand 4, single buffered']
    #allocation11 [shape = 'u8[1024]{0}', space=vmem, size = 0x400, scoped, tag = 'output window, operand 0, single buffered']
    %11 = vsyncpa [#allocation6], 0
    %12 = vsyncpa [#allocation4], 0
    %13 = vsyncpa [#allocation9], 0
    %14 = vsyncpa [#allocation5], 0
    // Predicated region
    $region2: #{rnn_net_pallas.1} parent=1 // pred_check
      _
    $region3: #{rnn_net_pallas.1} parent=1 // pred_check_branch
      %16 = sbr.rel (0) target = $region5
    $region4: #{rnn_net_pallas.1} parent=1 // pred_region
      %s18 = ssub.s32 32, 32
      %19 = vsyncadd [#allocation6], %s18
      %22 = dma.hbm_to_smem %s0, 32, [#allocation3], [#allocation6]
    $region5: #{rnn_net_pallas.1} parent=1 // pred_fallthru
      _
    // Predicated region
    $region6: #{rnn_net_pallas.1} parent=1 // pred_check
      _
    $region7: #{rnn_net_pallas.1} parent=1 // pred_check_branch
      %24 = sbr.rel (0) target = $region9
    $region8: #{rnn_net_pallas.1} parent=1 // pred_region
      %s26 = ssub.s32 256, 256
      %27 = vsyncadd [#allocation4], %s26
      %s28 = sshll.u32 [#allocation7], 4
      %s29 = int_to_ptr.vmem [resolvable:$true] %s28
      %34 = dma.hbm_to_vmem [thread:$0]  %s1, 256, %s29, [#allocation4], 128, 128, 8
    $region9: #{rnn_net_pallas.1} parent=1 // pred_fallthru
      _
    // Predicated region
    $region10: #{rnn_net_pallas.1} parent=1 // pred_check
      _
    $region11: #{rnn_net_pallas.1} parent=1 // pred_check_branch
      %36 = sbr.rel (0) target = $region13
    $region12: #{rnn_net_pallas.1} parent=1 // pred_region
      _
    $region13: #{rnn_net_pallas.1} parent=1 // pred_fallthru
      _
    // Predicated region
    $region14: #{rnn_net_pallas.1} parent=1 // pred_check
      _
    $region15: #{rnn_net_pallas.1} parent=1 // pred_check_branch
      %38 = sbr.rel (0) target = $region17
    $region16: #{rnn_net_pallas.1} parent=1 // pred_region
      %s40 = ssub.s32 256, 256
      %41 = vsyncadd [#allocation9], %s40
      %s42 = sshll.u32 [#allocation8], 4
      %s43 = int_to_ptr.vmem [resolvable:$true] %s42
      %48 = dma.hbm_to_vmem [thread:$0]  %s3, 256, %s43, [#allocation9], 64, 64, 4
    $region17: #{rnn_net_pallas.1} parent=1 // pred_fallthru
      _
    // Predicated region
    $region18: #{rnn_net_pallas.1} parent=1 // pred_check
      _
    $region19: #{rnn_net_pallas.1} parent=1 // pred_check_branch
      %50 = sbr.rel (0) target = $region21
    $region20: #{rnn_net_pallas.1} parent=1 // pred_region
      %s52 = ssub.s32 256, 256
      %53 = vsyncadd [#allocation9], %s52
      %s54 = sshll.u32 [#allocation10], 4
      %s55 = int_to_ptr.vmem [resolvable:$true] %s54
      %60 = dma.hbm_to_vmem [thread:$0]  %s4, 256, %s55, [#allocation9], 64, 64, 4
    $region21: #{rnn_net_pallas.1} parent=1 // pred_fallthru
      _
    // Predicated region
    $region22: #{rnn_net_pallas.1} parent=1 // pred_check
      _
    $region23: #{rnn_net_pallas.1} parent=1 // pred_check_branch
      %62 = sbr.rel (0) target = $region25
    $region24: #{rnn_net_pallas.1} parent=1 // pred_region
      _
    $region25: #{rnn_net_pallas.1} parent=1 // pred_fallthru
      _
    // Predicated region
    $region26: #{rnn_net_pallas.1} parent=1 // pred_check
      _
    $region27: #{rnn_net_pallas.1} parent=1 // pred_check_branch
      %64 = sbr.rel (0) target = $region29
    $region28: #{rnn_net_pallas.1} parent=1 // pred_region
      %65 = dma.done [#allocation6], 32
    $region29: #{rnn_net_pallas.1} parent=1 // pred_fallthru
      _
    // Predicated region
    $region30: #{rnn_net_pallas.1} parent=1 // pred_check
      _
    $region31: #{rnn_net_pallas.1} parent=1 // pred_check_branch
      %67 = sbr.rel (0) target = $region33
    $region32: #{rnn_net_pallas.1} parent=1 // pred_region
      %68 = dma.done [#allocation4], 256
    $region33: #{rnn_net_pallas.1} parent=1 // pred_fallthru
      _
    // Predicated region
    $region34: #{rnn_net_pallas.1} parent=1 // pred_check
      _
    $region35: #{rnn_net_pallas.1} parent=1 // pred_check_branch
      %70 = sbr.rel (0) target = $region37
    $region36: #{rnn_net_pallas.1} parent=1 // pred_region
      %71 = dma.done [#allocation9], 256
    $region37: #{rnn_net_pallas.1} parent=1 // pred_fallthru
      _
    // Predicated region
    $region38: #{rnn_net_pallas.1} parent=1 // pred_check
      _
    $region39: #{rnn_net_pallas.1} parent=1 // pred_check_branch
      %73 = sbr.rel (0) target = $region41
    $region40: #{rnn_net_pallas.1} parent=1 // pred_region
      %74 = dma.done [#allocation9], 256
    $region41: #{rnn_net_pallas.1} parent=1 // pred_fallthru
      _
    %75 = sfence
    %v77 = vld [vmem:[#allocation8] sm:$0xf]
    %v78 = vld [vmem:[#allocation8 + $0x4] sm:$0xf]
    %v79 = vld [vmem:[#allocation8 + $0x8] sm:$0xf]
    %v80 = vld [vmem:[#allocation8 + $0xc] sm:$0xf]
    %v81 = vld [vmem:[%s2] sm:$0x1]
    %s82 = sld [smem:[#allocation3]]
    %s83 = scalar_lea.vmem [#allocation7], %s82
    %v84 = vld [vmem:[%s83] sm:$0x1]
    %vm85 = vcmask 253952
    %86 = vst.msk [vmem:[#allocation2] sm:$0x1] %vm85, %v84
    %s87 = sld [smem:[#allocation3 + $0x80]]
    %s88 = scalar_lea.vmem [#allocation7], %s87
    %v89 = vld [vmem:[%s88] sm:$0x1]
    %90 = vst.msk [vmem:[#allocation2 + $0x1] sm:$0x1] %vm85, %v89
    %v91 = vld [vmem:[#allocation2] sm:$0x3]
    %v93 = vlaneseq
    %v94 = vshrl.u32 %v93, 7
    %v95 = vsub.s32 0, %v94
    %v96 = vrot.slane %v81, %v95
    %v98 = vadd.f32 %v91, %v96
    %v103 = vunpack.c.l.b16 %v77
    %v104 = vunpack.c.l.b16 %v78
    %v105 = vunpack.c.l.b16 %v79
    %v106 = vunpack.c.l.b16 %v80
    %v107 = vpack.c.b16 %v104, %v103
    %v108 = vpack.c.b16 %v106, %v105
    %vm111 = vcmask 261120
    %v113 = vsel %vm111, 0, 0
    %115 = vmatprep.subr.bf16.mxu0 0
    %116 = vmatpush1.bf16.msra.mxu0 0
    %117 = vmatprep.subr.bf16.mxu0 0
    %118 = vmatpush1.bf16.msra.mxu0 0
    %119 = vmatprep.subr.bf16.mxu0 0
    %120 = vmatpush1.bf16.msra.mxu0 0
    %121 = vmatprep.subr.bf16.mxu0 0
    %122 = vmatpush1.bf16.msra.mxu0 0
    %123 = vmatprep.subr.bf16.mxu0 0
    %124 = vmatpush1.bf16.msra.mxu0 0
    %125 = vmatprep.subr.bf16.mxu0 0
    %126 = vmatpush1.bf16.msra.mxu0 0
    %127 = vmatprep.subr.bf16.mxu0 0
    %128 = vmatpush1.bf16.msra.mxu0 %v108
    %129 = vmatprep.subr.bf16.mxu0 0
    %130 = vmatpush1.bf16.msra.mxu0 %v107
    %131 = vmatprep.subr.bf16.mxu0 0
    %132 = vmatpush2.bf16.msra.mxu0 0
    %133 = vmatprep.subr.bf16.mxu0 0
    %134 = vmatpush2.bf16.msra.mxu0 0
    %135 = vmatprep.subr.bf16.mxu0 0
    %136 = vmatpush2.bf16.msra.mxu0 0
    %137 = vmatprep.subr.bf16.mxu0 0
    %138 = vmatpush2.bf16.msra.mxu0 0
    %139 = vmatprep.subr.bf16.mxu0 0
    %140 = vmatpush2.bf16.msra.mxu0 0
    %141 = vmatprep.subr.bf16.mxu0 0
    %142 = vmatpush2.bf16.msra.mxu0 0
    %143 = vmatprep.subr.bf16.mxu0 0
    %144 = vmatpush2.bf16.msra.mxu0 0
    %145 = vmatprep.subr.bf16.mxu0 0
    %146 = vmatpush2.bf16.msra.mxu0 0
    %147 = vmatprep.mubr.bf16.mxu0 0
    %148 = vmatmul.mubr.bf16.gmra.mxu0 %v113
    %v149 = vpop.f32.mrf.mxu0
    %v150 = vadd.f32 0.0, %v149
    %v151 = vpop.f32.mrf.mxu0
    %v152 = vpop.f32.mrf.mxu0
    %v153 = vpop.f32.mrf.mxu0
    %154 = vdwg.mxu0
    %v155 = vadd.f32 %v98, %v150
    %v156 = vtanh.pop %v155
    %s157 = sld [smem:[#allocation3 + $0x1]]
    %s158 = scalar_lea.vmem [#allocation7], %s157
    %v159 = vld [vmem:[%s158] sm:$0x1]
    %160 = vst.msk [vmem:[#allocation2] sm:$0x1] %vm85, %v159
    %s161 = sld [smem:[#allocation3 + $0x81]]
    %s162 = scalar_lea.vmem [#allocation7], %s161
    %v163 = vld [vmem:[%s162] sm:$0x1]
    %164 = vst.msk [vmem:[#allocation2 + $0x1] sm:$0x1] %vm85, %v163
    %v165 = vld [vmem:[#allocation2] sm:$0x3]
    %v166 = vadd.f32 %v165, %v96
    %v167 = vpack.c.bf16 %v156, %v156
    %v169 = vsel %vm111, %v167, 0
    %171 = vmatprep.subr.bf16.mxu0 0
    %172 = vmatpush1.bf16.msra.mxu0 0
    %173 = vmatprep.subr.bf16.mxu0 0
    %174 = vmatpush1.bf16.msra.mxu0 0
    %175 = vmatprep.subr.bf16.mxu0 0
    %176 = vmatpush1.bf16.msra.mxu0 0
    %177 = vmatprep.subr.bf16.mxu0 0
    %178 = vmatpush1.bf16.msra.mxu0 0
    %179 = vmatprep.subr.bf16.mxu0 0
    %180 = vmatpush1.bf16.msra.mxu0 0
    %181 = vmatprep.subr.bf16.mxu0 0
    %182 = vmatpush1.bf16.msra.mxu0 0
    %183 = vmatprep.subr.bf16.mxu0 0
    %184 = vmatpush1.bf16.msra.mxu0 %v108
    %185 = vmatprep.subr.bf16.mxu0 0
    %186 = vmatpush1.bf16.msra.mxu0 %v107
    %187 = vmatprep.subr.bf16.mxu0 0
    %188 = vmatpush2.bf16.msra.mxu0 0
    %189 = vmatprep.subr.bf16.mxu0 0
    %190 = vmatpush2.bf16.msra.mxu0 0
    %191 = vmatprep.subr.bf16.mxu0 0
    %192 = vmatpush2.bf16.msra.mxu0 0
    %193 = vmatprep.subr.bf16.mxu0 0
    %194 = vmatpush2.bf16.msra.mxu0 0
    %195 = vmatprep.subr.bf16.mxu0 0
    %196 = vmatpush2.bf16.msra.mxu0 0
    %197 = vmatprep.subr.bf16.mxu0 0
    %198 = vmatpush2.bf16.msra.mxu0 0
    %199 = vmatprep.subr.bf16.mxu0 0
    %200 = vmatpush2.bf16.msra.mxu0 0
    %201 = vmatprep.subr.bf16.mxu0 0
    %202 = vmatpush2.bf16.msra.mxu0 0
    %203 = vmatprep.mubr.bf16.mxu0 0
    %204 = vmatmul.mubr.bf16.gmra.mxu0 %v169
    %v205 = vpop.f32.mrf.mxu0
    %v206 = vadd.f32 0.0, %v205
    %v207 = vpop.f32.mrf.mxu0
    %v208 = vpop.f32.mrf.mxu0
    %v209 = vpop.f32.mrf.mxu0
    %210 = vdwg.mxu0
    %v211 = vadd.f32 %v166, %v206
    %v212 = vtanh.pop %v211
    %s213 = sld [smem:[#allocation3 + $0x2]]
    %s214 = scalar_lea.vmem [#allocation7], %s213
    %v215 = vld [vmem:[%s214] sm:$0x1]
    %216 = vst.msk [vmem:[#allocation2] sm:$0x1] %vm85, %v215
    %s217 = sld [smem:[#allocation3 + $0x82]]
    %s218 = scalar_lea.vmem [#allocation7], %s217
    %v219 = vld [vmem:[%s218] sm:$0x1]
    %220 = vst.msk [vmem:[#allocation2 + $0x1] sm:$0x1] %vm85, %v219
    %v221 = vld [vmem:[#allocation2] sm:$0x3]
    %v222 = vadd.f32 %v221, %v96
    %v223 = vpack.c.bf16 %v212, %v212
    %v225 = vsel %vm111, %v223, 0
    %227 = vmatprep.subr.bf16.mxu0 0
    %228 = vmatpush1.bf16.msra.mxu0 0
    %229 = vmatprep.subr.bf16.mxu0 0
    %230 = vmatpush1.bf16.msra.mxu0 0
    %231 = vmatprep.subr.bf16.mxu0 0
    %232 = vmatpush1.bf16.msra.mxu0 0
    %233 = vmatprep.subr.bf16.mxu0 0
    %234 = vmatpush1.bf16.msra.mxu0 0
    %235 = vmatprep.subr.bf16.mxu0 0
    %236 = vmatpush1.bf16.msra.mxu0 0
    %237 = vmatprep.subr.bf16.mxu0 0
    %238 = vmatpush1.bf16.msra.mxu0 0
    %239 = vmatprep.subr.bf16.mxu0 0
    %240 = vmatpush1.bf16.msra.mxu0 %v108
    %241 = vmatprep.subr.bf16.mxu0 0
    %242 = vmatpush1.bf16.msra.mxu0 %v107
    %243 = vmatprep.subr.bf16.mxu0 0
    %244 = vmatpush2.bf16.msra.mxu0 0
    %245 = vmatprep.subr.bf16.mxu0 0
    %246 = vmatpush2.bf16.msra.mxu0 0
    %247 = vmatprep.subr.bf16.mxu0 0
    %248 = vmatpush2.bf16.msra.mxu0 0
    %249 = vmatprep.subr.bf16.mxu0 0
    %250 = vmatpush2.bf16.msra.mxu0 0
    %251 = vmatprep.subr.bf16.mxu0 0
    %252 = vmatpush2.bf16.msra.mxu0 0
    %253 = vmatprep.subr.bf16.mxu0 0
    %254 = vmatpush2.bf16.msra.mxu0 0
    %255 = vmatprep.subr.bf16.mxu0 0
    %256 = vmatpush2.bf16.msra.mxu0 0
    %257 = vmatprep.subr.bf16.mxu0 0
    %258 = vmatpush2.bf16.msra.mxu0 0
    %259 = vmatprep.mubr.bf16.mxu0 0
    %260 = vmatmul.mubr.bf16.gmra.mxu0 %v225
    %v261 = vpop.f32.mrf.mxu0
    %v262 = vadd.f32 0.0, %v261
    %v263 = vpop.f32.mrf.mxu0
    %v264 = vpop.f32.mrf.mxu0
    %v265 = vpop.f32.mrf.mxu0
    %266 = vdwg.mxu0
    %v267 = vadd.f32 %v222, %v262
    %v268 = vtanh.pop %v267
    %s269 = sld [smem:[#allocation3 + $0x3]]
    %s270 = scalar_lea.vmem [#allocation7], %s269
    %v271 = vld [vmem:[%s270] sm:$0x1]
    %272 = vst.msk [vmem:[#allocation2] sm:$0x1] %vm85, %v271
    %s273 = sld [smem:[#allocation3 + $0x83]]
    %s274 = scalar_lea.vmem [#allocation7], %s273
    %v275 = vld [vmem:[%s274] sm:$0x1]
    %276 = vst.msk [vmem:[#allocation2 + $0x1] sm:$0x1] %vm85, %v275
    %v277 = vld [vmem:[#allocation2] sm:$0x3]
    %v278 = vadd.f32 %v277, %v96
    %v279 = vpack.c.bf16 %v268, %v268
    %v281 = vsel %vm111, %v279, 0
    %283 = vmatprep.subr.bf16.mxu0 0
    %284 = vmatpush1.bf16.msra.mxu0 0
    %285 = vmatprep.subr.bf16.mxu0 0
    %286 = vmatpush1.bf16.msra.mxu0 0
    %287 = vmatprep.subr.bf16.mxu0 0
    %288 = vmatpush1.bf16.msra.mxu0 0
    %289 = vmatprep.subr.bf16.mxu0 0
    %290 = vmatpush1.bf16.msra.mxu0 0
    %291 = vmatprep.subr.bf16.mxu0 0
    %292 = vmatpush1.bf16.msra.mxu0 0
    %293 = vmatprep.subr.bf16.mxu0 0
    %294 = vmatpush1.bf16.msra.mxu0 0
    %295 = vmatprep.subr.bf16.mxu0 0
    %296 = vmatpush1.bf16.msra.mxu0 %v108
    %297 = vmatprep.subr.bf16.mxu0 0
    %298 = vmatpush1.bf16.msra.mxu0 %v107
    %299 = vmatprep.subr.bf16.mxu0 0
    %300 = vmatpush2.bf16.msra.mxu0 0
    %301 = vmatprep.subr.bf16.mxu0 0
    %302 = vmatpush2.bf16.msra.mxu0 0
    %303 = vmatprep.subr.bf16.mxu0 0
    %304 = vmatpush2.bf16.msra.mxu0 0
    %305 = vmatprep.subr.bf16.mxu0 0
    %306 = vmatpush2.bf16.msra.mxu0 0
    %307 = vmatprep.subr.bf16.mxu0 0
    %308 = vmatpush2.bf16.msra.mxu0 0
    %309 = vmatprep.subr.bf16.mxu0 0
    %310 = vmatpush2.bf16.msra.mxu0 0
    %311 = vmatprep.subr.bf16.mxu0 0
    %312 = vmatpush2.bf16.msra.mxu0 0
    %313 = vmatprep.subr.bf16.mxu0 0
    %314 = vmatpush2.bf16.msra.mxu0 0
    %315 = vmatprep.mubr.bf16.mxu0 0
    %316 = vmatmul.mubr.bf16.gmra.mxu0 %v281
    %v317 = vpop.f32.mrf.mxu0
    %v318 = vadd.f32 0.0, %v317
    %v319 = vpop.f32.mrf.mxu0
    %v320 = vpop.f32.mrf.mxu0
    %v321 = vpop.f32.mrf.mxu0
    %322 = vdwg.mxu0
    %v323 = vadd.f32 %v278, %v318
    %v324 = vtanh.pop %v323
    %s325 = sld [smem:[#allocation3 + $0x4]]
    %s326 = scalar_lea.vmem [#allocation7], %s325
    %v327 = vld [vmem:[%s326] sm:$0x1]
    %328 = vst.msk [vmem:[#allocation2] sm:$0x1] %vm85, %v327
    %s329 = sld [smem:[#allocation3 + $0x84]]
    %s330 = scalar_lea.vmem [#allocation7], %s329
    %v331 = vld [vmem:[%s330] sm:$0x1]
    %332 = vst.msk [vmem:[#allocation2 + $0x1] sm:$0x1] %vm85, %v331
    %v333 = vld [vmem:[#allocation2] sm:$0x3]
    %v334 = vadd.f32 %v333, %v96
    %v335 = vpack.c.bf16 %v324, %v324
    %v337 = vsel %vm111, %v335, 0
    %339 = vmatprep.subr.bf16.mxu0 0
    %340 = vmatpush1.bf16.msra.mxu0 0
    %341 = vmatprep.subr.bf16.mxu0 0
    %342 = vmatpush1.bf16.msra.mxu0 0
    %343 = vmatprep.subr.bf16.mxu0 0
    %344 = vmatpush1.bf16.msra.mxu0 0
    %345 = vmatprep.subr.bf16.mxu0 0
    %346 = vmatpush1.bf16.msra.mxu0 0
    %347 = vmatprep.subr.bf16.mxu0 0
    %348 = vmatpush1.bf16.msra.mxu0 0
    %349 = vmatprep.subr.bf16.mxu0 0
    %350 = vmatpush1.bf16.msra.mxu0 0
    %351 = vmatprep.subr.bf16.mxu0 0
    %352 = vmatpush1.bf16.msra.mxu0 %v108
    %353 = vmatprep.subr.bf16.mxu0 0
    %354 = vmatpush1.bf16.msra.mxu0 %v107
    %355 = vmatprep.subr.bf16.mxu0 0
    %356 = vmatpush2.bf16.msra.mxu0 0
    %357 = vmatprep.subr.bf16.mxu0 0
    %358 = vmatpush2.bf16.msra.mxu0 0
    %359 = vmatprep.subr.bf16.mxu0 0
    %360 = vmatpush2.bf16.msra.mxu0 0
    %361 = vmatprep.subr.bf16.mxu0 0
    %362 = vmatpush2.bf16.msra.mxu0 0
    %363 = vmatprep.subr.bf16.mxu0 0
    %364 = vmatpush2.bf16.msra.mxu0 0
    %365 = vmatprep.subr.bf16.mxu0 0
    %366 = vmatpush2.bf16.msra.mxu0 0
    %367 = vmatprep.subr.bf16.mxu0 0
    %368 = vmatpush2.bf16.msra.mxu0 0
    %369 = vmatprep.subr.bf16.mxu0 0
    %370 = vmatpush2.bf16.msra.mxu0 0
    %371 = vmatprep.mubr.bf16.mxu0 0
    %372 = vmatmul.mubr.bf16.gmra.mxu0 %v337
    %v373 = vpop.f32.mrf.mxu0
    %v374 = vadd.f32 0.0, %v373
    %v375 = vpop.f32.mrf.mxu0
    %v376 = vpop.f32.mrf.mxu0
    %v377 = vpop.f32.mrf.mxu0
    %378 = vdwg.mxu0
    %v379 = vadd.f32 %v334, %v374
    %v380 = vtanh.pop %v379
    %s381 = sld [smem:[#allocation3 + $0x5]]
    %s382 = scalar_lea.vmem [#allocation7], %s381
    %v383 = vld [vmem:[%s382] sm:$0x1]
    %384 = vst.msk [vmem:[#allocation2] sm:$0x1] %vm85, %v383
    %s385 = sld [smem:[#allocation3 + $0x85]]
    %s386 = scalar_lea.vmem [#allocation7], %s385
    %v387 = vld [vmem:[%s386] sm:$0x1]
    %388 = vst.msk [vmem:[#allocation2 + $0x1] sm:$0x1] %vm85, %v387
    %v389 = vld [vmem:[#allocation2] sm:$0x3]
    %v390 = vadd.f32 %v389, %v96
    %v391 = vpack.c.bf16 %v380, %v380
    %v393 = vsel %vm111, %v391, 0
    %395 = vmatprep.subr.bf16.mxu0 0
    %396 = vmatpush1.bf16.msra.mxu0 0
    %397 = vmatprep.subr.bf16.mxu0 0
    %398 = vmatpush1.bf16.msra.mxu0 0
    %399 = vmatprep.subr.bf16.mxu0 0
    %400 = vmatpush1.bf16.msra.mxu0 0
    %401 = vmatprep.subr.bf16.mxu0 0
    %402 = vmatpush1.bf16.msra.mxu0 0
    %403 = vmatprep.subr.bf16.mxu0 0
    %404 = vmatpush1.bf16.msra.mxu0 0
    %405 = vmatprep.subr.bf16.mxu0 0
    %406 = vmatpush1.bf16.msra.mxu0 0
    %407 = vmatprep.subr.bf16.mxu0 0
    %408 = vmatpush1.bf16.msra.mxu0 %v108
    %409 = vmatprep.subr.bf16.mxu0 0
    %410 = vmatpush1.bf16.msra.mxu0 %v107
    %411 = vmatprep.subr.bf16.mxu0 0
    %412 = vmatpush2.bf16.msra.mxu0 0
    %413 = vmatprep.subr.bf16.mxu0 0
    %414 = vmatpush2.bf16.msra.mxu0 0
    %415 = vmatprep.subr.bf16.mxu0 0
    %416 = vmatpush2.bf16.msra.mxu0 0
    %417 = vmatprep.subr.bf16.mxu0 0
    %418 = vmatpush2.bf16.msra.mxu0 0
    %419 = vmatprep.subr.bf16.mxu0 0
    %420 = vmatpush2.bf16.msra.mxu0 0
    %421 = vmatprep.subr.bf16.mxu0 0
    %422 = vmatpush2.bf16.msra.mxu0 0
    %423 = vmatprep.subr.bf16.mxu0 0
    %424 = vmatpush2.bf16.msra.mxu0 0
    %425 = vmatprep.subr.bf16.mxu0 0
    %426 = vmatpush2.bf16.msra.mxu0 0
    %427 = vmatprep.mubr.bf16.mxu0 0
    %428 = vmatmul.mubr.bf16.gmra.mxu0 %v393
    %v429 = vpop.f32.mrf.mxu0
    %v430 = vadd.f32 0.0, %v429
    %v431 = vpop.f32.mrf.mxu0
    %v432 = vpop.f32.mrf.mxu0
    %v433 = vpop.f32.mrf.mxu0
    %434 = vdwg.mxu0
    %v435 = vadd.f32 %v390, %v430
    %v436 = vtanh.pop %v435
    %s437 = sld [smem:[#allocation3 + $0x6]]
    %s438 = scalar_lea.vmem [#allocation7], %s437
    %v439 = vld [vmem:[%s438] sm:$0x1]
    %440 = vst.msk [vmem:[#allocation2] sm:$0x1] %vm85, %v439
    %s441 = sld [smem:[#allocation3 + $0x86]]
    %s442 = scalar_lea.vmem [#allocation7], %s441
    %v443 = vld [vmem:[%s442] sm:$0x1]
    %444 = vst.msk [vmem:[#allocation2 + $0x1] sm:$0x1] %vm85, %v443
    %v445 = vld [vmem:[#allocation2] sm:$0x3]
    %v446 = vadd.f32 %v445, %v96
    %v447 = vpack.c.bf16 %v436, %v436
    %v449 = vsel %vm111, %v447, 0
    %451 = vmatprep.subr.bf16.mxu0 0
    %452 = vmatpush1.bf16.msra.mxu0 0
    %453 = vmatprep.subr.bf16.mxu0 0
    %454 = vmatpush1.bf16.msra.mxu0 0
    %455 = vmatprep.subr.bf16.mxu0 0
    %456 = vmatpush1.bf16.msra.mxu0 0
    %457 = vmatprep.subr.bf16.mxu0 0
    %458 = vmatpush1.bf16.msra.mxu0 0
    %459 = vmatprep.subr.bf16.mxu0 0
    %460 = vmatpush1.bf16.msra.mxu0 0
    %461 = vmatprep.subr.bf16.mxu0 0
    %462 = vmatpush1.bf16.msra.mxu0 0
    %463 = vmatprep.subr.bf16.mxu0 0
    %464 = vmatpush1.bf16.msra.mxu0 %v108
    %465 = vmatprep.subr.bf16.mxu0 0
    %466 = vmatpush1.bf16.msra.mxu0 %v107
    %467 = vmatprep.subr.bf16.mxu0 0
    %468 = vmatpush2.bf16.msra.mxu0 0
    %469 = vmatprep.subr.bf16.mxu0 0
    %470 = vmatpush2.bf16.msra.mxu0 0
    %471 = vmatprep.subr.bf16.mxu0 0
    %472 = vmatpush2.bf16.msra.mxu0 0
    %473 = vmatprep.subr.bf16.mxu0 0
    %474 = vmatpush2.bf16.msra.mxu0 0
    %475 = vmatprep.subr.bf16.mxu0 0
    %476 = vmatpush2.bf16.msra.mxu0 0
    %477 = vmatprep.subr.bf16.mxu0 0
    %478 = vmatpush2.bf16.msra.mxu0 0
    %479 = vmatprep.subr.bf16.mxu0 0
    %480 = vmatpush2.bf16.msra.mxu0 0
    %481 = vmatprep.subr.bf16.mxu0 0
    %482 = vmatpush2.bf16.msra.mxu0 0
    %483 = vmatprep.mubr.bf16.mxu0 0
    %484 = vmatmul.mubr.bf16.gmra.mxu0 %v449
    %v485 = vpop.f32.mrf.mxu0
    %v486 = vadd.f32 0.0, %v485
    %v487 = vpop.f32.mrf.mxu0
    %v488 = vpop.f32.mrf.mxu0
    %v489 = vpop.f32.mrf.mxu0
    %490 = vdwg.mxu0
    %v491 = vadd.f32 %v446, %v486
    %v492 = vtanh.pop %v491
    %s493 = sld [smem:[#allocation3 + $0x7]]
    %s494 = scalar_lea.vmem [#allocation7], %s493
    %v495 = vld [vmem:[%s494] sm:$0x1]
    %496 = vst.msk [vmem:[#allocation2] sm:$0x1] %vm85, %v495
    %s497 = sld [smem:[#allocation3 + $0x87]]
    %s498 = scalar_lea.vmem [#allocation7], %s497
    %v499 = vld [vmem:[%s498] sm:$0x1]
    %500 = vst.msk [vmem:[#allocation2 + $0x1] sm:$0x1] %vm85, %v499
    %v501 = vld [vmem:[#allocation2] sm:$0x3]
    %v502 = vadd.f32 %v501, %v96
    %v503 = vpack.c.bf16 %v492, %v492
    %v505 = vsel %vm111, %v503, 0
    %507 = vmatprep.subr.bf16.mxu0 0
    %508 = vmatpush1.bf16.msra.mxu0 0
    %509 = vmatprep.subr.bf16.mxu0 0
    %510 = vmatpush1.bf16.msra.mxu0 0
    %511 = vmatprep.subr.bf16.mxu0 0
    %512 = vmatpush1.bf16.msra.mxu0 0
    %513 = vmatprep.subr.bf16.mxu0 0
    %514 = vmatpush1.bf16.msra.mxu0 0
    %515 = vmatprep.subr.bf16.mxu0 0
    %516 = vmatpush1.bf16.msra.mxu0 0
    %517 = vmatprep.subr.bf16.mxu0 0
    %518 = vmatpush1.bf16.msra.mxu0 0
    %519 = vmatprep.subr.bf16.mxu0 0
    %520 = vmatpush1.bf16.msra.mxu0 %v108
    %521 = vmatprep.subr.bf16.mxu0 0
    %522 = vmatpush1.bf16.msra.mxu0 %v107
    %523 = vmatprep.subr.bf16.mxu0 0
    %524 = vmatpush2.bf16.msra.mxu0 0
    %525 = vmatprep.subr.bf16.mxu0 0
    %526 = vmatpush2.bf16.msra.mxu0 0
    %527 = vmatprep.subr.bf16.mxu0 0
    %528 = vmatpush2.bf16.msra.mxu0 0
    %529 = vmatprep.subr.bf16.mxu0 0
    %530 = vmatpush2.bf16.msra.mxu0 0
    %531 = vmatprep.subr.bf16.mxu0 0
    %532 = vmatpush2.bf16.msra.mxu0 0
    %533 = vmatprep.subr.bf16.mxu0 0
    %534 = vmatpush2.bf16.msra.mxu0 0
    %535 = vmatprep.subr.bf16.mxu0 0
    %536 = vmatpush2.bf16.msra.mxu0 0
    %537 = vmatprep.subr.bf16.mxu0 0
    %538 = vmatpush2.bf16.msra.mxu0 0
    %539 = vmatprep.mubr.bf16.mxu0 0
    %540 = vmatmul.mubr.bf16.gmra.mxu0 %v505
    %v541 = vpop.f32.mrf.mxu0
    %v542 = vadd.f32 0.0, %v541
    %v543 = vpop.f32.mrf.mxu0
    %v544 = vpop.f32.mrf.mxu0
    %v545 = vpop.f32.mrf.mxu0
    %546 = vdwg.mxu0
    %v547 = vadd.f32 %v502, %v542
    %v548 = vtanh.pop %v547
    %v549 = vpack.c.bf16 %v548, %v548
    %v550 = vld [vmem:[#allocation10] sm:$0xf]
    %v551 = vld [vmem:[#allocation10 + $0x4] sm:$0xf]
    %v552 = vld [vmem:[#allocation10 + $0x8] sm:$0xf]
    %v553 = vld [vmem:[#allocation10 + $0xc] sm:$0xf]
    %v554 = vld [vmem:[%s5] sm:$0x1]
    %v556 = vlaneseq
    %v557 = vshrl.u32 %v556, 7
    %v558 = vsub.s32 0, %v557
    %v559 = vrot.slane %v554, %v558
    %v565 = vunpack.c.l.b16 %v550
    %v566 = vunpack.c.l.b16 %v551
    %v567 = vunpack.c.l.b16 %v552
    %v568 = vunpack.c.l.b16 %v553
    %v569 = vpack.c.b16 %v566, %v565
    %v570 = vpack.c.b16 %v568, %v567
    %v574 = vsel %vm111, %v549, 0
    %576 = vmatprep.subr.bf16.mxu0 0
    %577 = vmatpush1.bf16.msra.mxu0 0
    %578 = vmatprep.subr.bf16.mxu0 0
    %579 = vmatpush1.bf16.msra.mxu0 0
    %580 = vmatprep.subr.bf16.mxu0 0
    %581 = vmatpush1.bf16.msra.mxu0 0
    %582 = vmatprep.subr.bf16.mxu0 0
    %583 = vmatpush1.bf16.msra.mxu0 0
    %584 = vmatprep.subr.bf16.mxu0 0
    %585 = vmatpush1.bf16.msra.mxu0 0
    %586 = vmatprep.subr.bf16.mxu0 0
    %587 = vmatpush1.bf16.msra.mxu0 0
    %588 = vmatprep.subr.bf16.mxu0 0
    %589 = vmatpush1.bf16.msra.mxu0 %v570
    %590 = vmatprep.subr.bf16.mxu0 0
    %591 = vmatpush1.bf16.msra.mxu0 %v569
    %592 = vmatprep.subr.bf16.mxu0 0
    %593 = vmatpush2.bf16.msra.mxu0 0
    %594 = vmatprep.subr.bf16.mxu0 0
    %595 = vmatpush2.bf16.msra.mxu0 0
    %596 = vmatprep.subr.bf16.mxu0 0
    %597 = vmatpush2.bf16.msra.mxu0 0
    %598 = vmatprep.subr.bf16.mxu0 0
    %599 = vmatpush2.bf16.msra.mxu0 0
    %600 = vmatprep.subr.bf16.mxu0 0
    %601 = vmatpush2.bf16.msra.mxu0 0
    %602 = vmatprep.subr.bf16.mxu0 0
    %603 = vmatpush2.bf16.msra.mxu0 0
    %604 = vmatprep.subr.bf16.mxu0 0
    %605 = vmatpush2.bf16.msra.mxu0 0
    %606 = vmatprep.subr.bf16.mxu0 0
    %607 = vmatpush2.bf16.msra.mxu0 0
    %608 = vmatprep.mubr.bf16.mxu0 0
    %609 = vmatmul.mubr.bf16.gmra.mxu0 %v574
    %v610 = vpop.f32.mrf.mxu0
    %v611 = vadd.f32 %v559, %v610
    %v612 = vpop.f32.mrf.mxu0
    %v613 = vpop.f32.mrf.mxu0
    %v614 = vpop.f32.mrf.mxu0
    %615 = vdwg.mxu0
    %616 = vst [vmem:[#allocation11] sm:$0x3] %v611
    // Predicated region
    $region42: #{rnn_net_pallas.1} parent=1 // pred_check
      _
    $region43: #{rnn_net_pallas.1} parent=1 // pred_check_branch
      %618 = sbr.rel (0) target = $region45
    $region44: #{rnn_net_pallas.1} parent=1 // pred_region
      %s620 = ssub.s32 32, 32
      %621 = vsyncadd [#allocation5], %s620
      %s623 = sshll.u32 [#allocation11], 4
      %s624 = int_to_ptr.vmem [resolvable:$true] %s623
      %626 = dma.vmem_to_hbm [thread:$0]  %s624, 32, %s6, [#allocation5]
    $region45: #{rnn_net_pallas.1} parent=1 // pred_fallthru
      _
    // Predicated region
    $region46: #{rnn_net_pallas.1} parent=1 // pred_check
      _
    $region47: #{rnn_net_pallas.1} parent=1 // pred_check_branch
      %628 = sbr.rel (0) target = $region49
    $region48: #{rnn_net_pallas.1} parent=1 // pred_region
      %629 = dma.done [#allocation5], 32
    $region49: #{rnn_net_pallas.1} parent=1 // pred_fallthru
      _
    %630 = vsyncpa [#allocation4], 1
    %631 = vsyncpa [#allocation9], 1
    %632 = vsyncpa [#allocation5], 1
    %633 = vsyncpa [#allocation6], 1

</llo_original>
